<compile_context>
chip_gen: v7x
topology: tpu7x:2x2x1
jax: 0.10.0
libtpu: 0.0.40
codegen_flags: <defaults>
</compile_context>

<pallas_src>
import functools

import jax
import jax.numpy as jnp
from jax import lax
from jax.experimental import pallas as pl
from jax.experimental.pallas import tpu as pltpu


HIDDEN = 128     # fc output width (matches nn.Linear(no_states, 128))
LANE = 128       # TPU lane width
SUBLANE = 8      # f32 sublane tile


def _round_up(x, m):
    return (x + m - 1) // m * m


def actor_critic_kernel(state_ref, w1_ref, b1_ref, wh_ref, bh_ref, out_ref, *,
                        no_actions, mxu_dtype):
    # fc + ReLU (MXU matmul, VPU max)
    x = state_ref[...].astype(mxu_dtype)
    h = jnp.dot(x, w1_ref[...].astype(mxu_dtype),
                preferred_element_type=jnp.float32) + b1_ref[...]
    h = jnp.maximum(h, 0.0)

    # fused actor|critic head: one lane-dense MXU matmul -> [tb, 128]
    #   cols [0, A)      : actor logits
    #   cols [A, 2A)     : critic (q) outputs
    #   cols [2A, 128)   : zero padding
    z = jnp.dot(h.astype(mxu_dtype), wh_ref[...].astype(mxu_dtype),
                preferred_element_type=jnp.float32) + bh_ref[...]

    col = lax.broadcasted_iota(jnp.int32, z.shape, 1)
    actor_mask = col < no_actions

    # NaN-proof masked softmax over the actor columns only: a large-finite mask for
    # the max and masking AFTER the exp -> no -inf ever enters the arithmetic.
    masked = jnp.where(actor_mask, z, jnp.finfo(jnp.float32).min)
    m = jnp.max(masked, axis=-1, keepdims=True)
    e = jnp.where(actor_mask, jnp.exp(z - m), 0.0)
    s = jnp.sum(e, axis=-1, keepdims=True)
    # EUP approximate reciprocal + one Newton-Raphson refinement (keeps 1e-5 parity).
    inv = pl.reciprocal(s, approx=True)
    inv = inv * (2.0 - s * inv)
    policy = e * inv

    # single lane-dense output slab: actor cols hold the policy, the rest (incl. the
    # critic cols) hold the raw head output; the wrapper slices policy / q out.
    out_ref[...] = jnp.where(actor_mask, policy, z)


def prepare_params(params):
    """One-time (per parameter update) layout prep.

    Pads / fuses the weights so the per-forward wrapper only pads the state:
      w1_p [K_pad, 128], b1_p [1, 128], wh [128, 128] (actor|critic|zeros), bh [1, 128].
    Weights are stored transposed vs. PyTorch, i.e. [in_features, out_features].
    """
    w1, b1, wa, ba, wc, bc = params
    K, hidden = w1.shape
    assert hidden == HIDDEN
    A = wa.shape[1]
    assert 2 * A <= LANE  # TODO(synk): generalize fused-head padding when 2*no_actions > 128

    f32 = jnp.float32
    K_pad = _round_up(max(K, SUBLANE), SUBLANE)          # sublane-aligned contraction dim
    w1_p = jnp.zeros((K_pad, HIDDEN), f32).at[:K, :].set(w1.astype(f32))
    b1_p = b1.reshape(1, HIDDEN).astype(f32)
    wh = (jnp.zeros((HIDDEN, LANE), f32)
          .at[:, :A].set(wa.astype(f32))
          .at[:, A:2 * A].set(wc.astype(f32)))
    bh = (jnp.zeros((1, LANE), f32)
          .at[:, :A].set(ba.reshape(1, A).astype(f32))
          .at[:, A:2 * A].set(bc.reshape(1, A).astype(f32)))
    return (w1_p, b1_p, wh, bh)


@functools.partial(jax.jit, static_argnames=("no_actions", "block_b", "mxu_dtype"))
def actor_critic_forward(state, prepared, *, no_actions, block_b=2048,
                         mxu_dtype=jnp.float32):
    """state: [B, no_states] float32. Returns (policy [B, A], q_value [B, A])."""
    w1_p, b1_p, wh, bh = prepared
    B, K = state.shape
    K_pad = w1_p.shape[0]
    A = no_actions
    f32 = jnp.float32

    # Batch tiling: >= 2 tiles whenever the batch can be split (v7x megacore), tile
    # a multiple of 8, and total batch padding capped at grid_b * 8 rows (never a
    # full tile of padding).
    B_pad = _round_up(max(B, SUBLANE), SUBLANE)
    grid_b = pl.cdiv(B_pad, block_b)
    if B_pad >= 2 * SUBLANE:
        grid_b = max(grid_b, 2)
    tb = _round_up(pl.cdiv(B_pad, grid_b), SUBLANE)
    B_full = grid_b * tb

    if (B_full, K_pad) == (B, K) and state.dtype == f32:
        state_p = state
    else:
        state_p = jnp.zeros((B_full, K_pad), f32).at[:B, :K].set(state.astype(f32))

    flops = 2 * B_full * (K_pad * HIDDEN + HIDDEN * LANE)
    bytes_accessed = 4 * (state_p.size + w1_p.size + b1_p.size + wh.size + bh.size
                          + B_full * LANE)

    grid_spec = pltpu.PrefetchScalarGridSpec(
        num_scalar_prefetch=0,
        grid=(grid_b,),
        in_specs=[
            pl.BlockSpec((tb, K_pad), lambda i: (i, 0)),       # state tile: streamed
            pl.BlockSpec((K_pad, HIDDEN), lambda i: (0, 0)),   # w1: VMEM-resident
            pl.BlockSpec((1, HIDDEN), lambda i: (0, 0)),       # b1: VMEM-resident
            pl.BlockSpec((HIDDEN, LANE), lambda i: (0, 0)),    # fused head W: resident
            pl.BlockSpec((1, LANE), lambda i: (0, 0)),         # fused head b: resident
        ],
        out_specs=pl.BlockSpec((tb, LANE), lambda i: (i, 0)),  # lane-dense output tile
    )

    out = pl.pallas_call(
        functools.partial(actor_critic_kernel, no_actions=A, mxu_dtype=mxu_dtype),
        out_shape=jax.ShapeDtypeStruct((B_full, LANE), f32),
        grid_spec=grid_spec,
        compiler_params=pltpu.CompilerParams(
            dimension_semantics=("parallel",),       # shard batch tiles across TCs (v7x)
            vmem_limit_bytes=32 * 1024 * 1024,       # far above actual use; explicit only
        ),
        cost_estimate=pl.CostEstimate(
            flops=flops,
            transcendentals=B_full * LANE,           # exp in the softmax
            bytes_accessed=bytes_accessed,
        ),
    )(state_p, w1_p, b1_p, wh, bh)

    policy = out[:B, :A]
    q_value = out[:B, A:2 * A]
    return policy, q_value


def init_params(key, no_states, no_actions):
    """Deterministic PyTorch-Linear-style init (uniform +/- 1/sqrt(fan_in)).
    Weights are stored as [in, out]."""
    k1, k2, k3, k4, k5, k6 = jax.random.split(key, 6)
    lim1 = 1.0 / jnp.sqrt(no_states)
    lim2 = 1.0 / jnp.sqrt(HIDDEN)
    w1 = jax.random.uniform(k1, (no_states, HIDDEN), jnp.float32, -lim1, lim1)
    b1 = jax.random.uniform(k2, (1, HIDDEN), jnp.float32, -lim1, lim1)
    wa = jax.random.uniform(k3, (HIDDEN, no_actions), jnp.float32, -lim2, lim2)
    ba = jax.random.uniform(k4, (1, no_actions), jnp.float32, -lim2, lim2)
    wc = jax.random.uniform(k5, (HIDDEN, no_actions), jnp.float32, -lim2, lim2)
    bc = jax.random.uniform(k6, (1, no_actions), jnp.float32, -lim2, lim2)
    return (w1, b1, wa, ba, wc, bc)


def _reference(state, params):
    w1, b1, wa, ba, wc, bc = params
    h = jnp.maximum(state @ w1 + b1, 0.0)
    return jax.nn.softmax(h @ wa + ba, axis=-1), h @ wc + bc


if __name__ == "__main__":
    key = jax.random.PRNGKey(0)
    k_params, k_state, k_big = jax.random.split(key, 3)

    batch = 2
    no_states = 4
    no_actions = 6

    params = init_params(k_params, no_states, no_actions)
    prepared = prepare_params(params)      # hoisted weight padding / head fusion
    state = jax.random.normal(k_state, (batch, no_states), jnp.float32)

    # small-shape run (matches the toy module usage; single tile, latency path)
    policy, q_value = actor_critic_forward(state, prepared, no_actions=no_actions)
    jax.block_until_ready((policy, q_value))

    pol_ref, q_ref = _reference(state, params)
    assert policy.shape == (batch, no_actions) and q_value.shape == (batch, no_actions)
    assert jnp.allclose(policy, pol_ref, atol=1e-5), "policy mismatch"
    assert jnp.allclose(q_value, q_ref, atol=1e-5), "q_value mismatch"
    assert jnp.allclose(jnp.sum(policy, axis=-1), 1.0, atol=1e-5), "policy not normalized"

    # larger batch: exercises the multi-tile grid (>=2 tiles) without full-tile padding
    big_state = jax.random.normal(k_big, (600, no_states), jnp.float32)
    big_policy, big_q = actor_critic_forward(big_state, prepared, no_actions=no_actions)
    jax.block_until_ready((big_policy, big_q))
    big_pol_ref, big_q_ref = _reference(big_state, params)
    assert jnp.allclose(big_policy, big_pol_ref, atol=1e-5), "big policy mismatch"
    assert jnp.allclose(big_q, big_q_ref, atol=1e-5), "big q_value mismatch"

    print("KERNEL_OK")
</pallas_src>

<mosaic_0001>
module attributes {stable_mosaic.version = 11 : i64} {
  func.func @actor_critic_kernel(%arg0: i32, %arg1: memref<8x8xf32, #tpu.memory_space<vmem>>, %arg2: memref<8x128xf32, #tpu.memory_space<vmem>>, %arg3: memref<1x128xf32, #tpu.memory_space<vmem>>, %arg4: memref<128x128xf32, #tpu.memory_space<vmem>>, %arg5: memref<1x128xf32, #tpu.memory_space<vmem>>, %arg6: memref<8x128xf32, #tpu.memory_space<vmem>>) attributes {dimension_semantics = [#tpu.dimension_semantics<parallel>], iteration_bounds = array<i64: 1>, scalar_prefetch = 0 : i64, scratch_operands = 0 : i64, tpu.core_type = #tpu.core_type<tc>, window_params = [{transform_indices = @transform_0, window_bounds = array<i64: 8, 8>}, {pipeline_mode = #tpu.pipeline_mode<synchronous>, transform_indices = @transform_1, window_bounds = array<i64: 8, 128>}, {pipeline_mode = #tpu.pipeline_mode<synchronous>, transform_indices = @transform_2, window_bounds = array<i64: 1, 128>}, {pipeline_mode = #tpu.pipeline_mode<synchronous>, transform_indices = @transform_3, window_bounds = array<i64: 128, 128>}, {pipeline_mode = #tpu.pipeline_mode<synchronous>, transform_indices = @transform_4, window_bounds = array<i64: 1, 128>}, {transform_indices = @transform_5, window_bounds = array<i64: 8, 128>}]} {
    %c0 = arith.constant 0 : index
    %c0_0 = arith.constant 0 : index
    %0 = vector.load %arg1[%c0, %c0_0] : memref<8x8xf32, #tpu.memory_space<vmem>>, vector<8x8xf32>
    %c0_1 = arith.constant 0 : index
    %c0_2 = arith.constant 0 : index
    %1 = vector.load %arg2[%c0_1, %c0_2] : memref<8x128xf32, #tpu.memory_space<vmem>>, vector<8x128xf32>
    %cst = arith.constant dense<0.000000e+00> : vector<8x128xf32>
    %2 = tpu.matmul %0, %1, %cst {dimension_numbers = #tpu.dot_dimension_numbers<[1], [0], [0], [1], [0, 0, 1, 1], [], []>} : vector<8x8xf32>, vector<8x128xf32>, vector<8x128xf32> -> vector<8x128xf32>
    %c0_3 = arith.constant 0 : index
    %c0_4 = arith.constant 0 : index
    %3 = vector.load %arg3[%c0_3, %c0_4] : memref<1x128xf32, #tpu.memory_space<vmem>>, vector<1x128xf32>
    %4 = vector.broadcast %3 : vector<1x128xf32> to vector<8x128xf32>
    %5 = arith.addf %2, %4 : vector<8x128xf32>
    %cst_5 = arith.constant 0.000000e+00 : f32
    %6 = vector.broadcast %cst_5 : f32 to vector<8x128xf32>
    %7 = arith.maximumf %5, %6 : vector<8x128xf32>
    %c0_6 = arith.constant 0 : index
    %c0_7 = arith.constant 0 : index
    %8 = vector.load %arg4[%c0_6, %c0_7] : memref<128x128xf32, #tpu.memory_space<vmem>>, vector<128x128xf32>
    %cst_8 = arith.constant dense<0.000000e+00> : vector<8x128xf32>
    %9 = tpu.matmul %7, %8, %cst_8 {dimension_numbers = #tpu.dot_dimension_numbers<[1], [0], [0], [1], [0, 0, 1, 1], [], []>} : vector<8x128xf32>, vector<128x128xf32>, vector<8x128xf32> -> vector<8x128xf32>
    %c0_9 = arith.constant 0 : index
    %c0_10 = arith.constant 0 : index
    %10 = vector.load %arg5[%c0_9, %c0_10] : memref<1x128xf32, #tpu.memory_space<vmem>>, vector<1x128xf32>
    %11 = vector.broadcast %10 : vector<1x128xf32> to vector<8x128xf32>
    %12 = arith.addf %9, %11 : vector<8x128xf32>
    %13 = tpu.iota {dimensions = array<i32: 1>} : vector<8x128xi32>
    %c6_i32 = arith.constant 6 : i32
    %14 = vector.broadcast %c6_i32 : i32 to vector<8x128xi32>
    %15 = arith.cmpi slt, %13, %14 : vector<8x128xi32>
    %cst_11 = arith.constant -3.40282347E+38 : f32
    %16 = vector.broadcast %cst_11 : f32 to vector<8x128xf32>
    %17 = arith.select %15, %12, %16 : vector<8x128xi1>, vector<8x128xf32>
    %cst_12 = arith.constant dense<0xFF800000> : vector<8xf32>
    %18 = vector.multi_reduction <maximumf>, %17, %cst_12 [1] : vector<8x128xf32> to vector<8xf32>
    %19 = vector.shape_cast %18 : vector<8xf32> to vector<8x1xf32>
    %20 = vector.broadcast %19 : vector<8x1xf32> to vector<8x128xf32>
    %21 = arith.subf %12, %20 : vector<8x128xf32>
    %22 = math.exp %21 : vector<8x128xf32>
    %cst_13 = arith.constant 0.000000e+00 : f32
    %23 = vector.broadcast %cst_13 : f32 to vector<8x128xf32>
    %24 = arith.select %15, %22, %23 : vector<8x128xi1>, vector<8x128xf32>
    %cst_14 = arith.constant dense<0.000000e+00> : vector<8xf32>
    %25 = vector.multi_reduction <add>, %24, %cst_14 [1] : vector<8x128xf32> to vector<8xf32>
    %26 = vector.shape_cast %25 : vector<8xf32> to vector<8x1xf32>
    %27 = tpu.reciprocal %26 {approx = true} : vector<8x1xf32> -> vector<8x1xf32>
    %28 = arith.mulf %26, %27 : vector<8x1xf32>
    %cst_15 = arith.constant 2.000000e+00 : f32
    %29 = vector.broadcast %cst_15 : f32 to vector<8x1xf32>
    %30 = arith.subf %29, %28 : vector<8x1xf32>
    %31 = arith.mulf %27, %30 : vector<8x1xf32>
    %32 = vector.broadcast %31 : vector<8x1xf32> to vector<8x128xf32>
    %33 = arith.mulf %24, %32 : vector<8x128xf32>
    %34 = arith.select %15, %33, %12 : vector<8x128xi1>, vector<8x128xf32>
    %c0_16 = arith.constant 0 : index
    %c0_17 = arith.constant 0 : index
    %35 = vector.load %arg6[%c0_16, %c0_17] : memref<8x128xf32, #tpu.memory_space<vmem>>, vector<8x128xf32>
    tpu.vector_store %arg6[%c0_16, %c0_17], %34 {strides = array<i32>} : memref<8x128xf32, #tpu.memory_space<vmem>>, vector<8x128xf32>,
    return
  }
  func.func @transform_0(%arg0: i32) -> (i32, i32) {
    %c0_i32 = arith.constant 0 : i32
    %c0_i32_0 = arith.constant 0 : i32
    return %arg0, %c0_i32 : i32, i32
  }
  func.func @transform_1(%arg0: i32) -> (i32, i32) {
    %c0_i32 = arith.constant 0 : i32
    %c0_i32_0 = arith.constant 0 : i32
    %c0_i32_1 = arith.constant 0 : i32
    return %c0_i32, %c0_i32_0 : i32, i32
  }
  func.func @transform_2(%arg0: i32) -> (i32, i32) {
    %c0_i32 = arith.constant 0 : i32
    %c0_i32_0 = arith.constant 0 : i32
    %c0_i32_1 = arith.constant 0 : i32
    return %c0_i32, %c0_i32_0 : i32, i32
  }
  func.func @transform_3(%arg0: i32) -> (i32, i32) {
    %c0_i32 = arith.constant 0 : i32
    %c0_i32_0 = arith.constant 0 : i32
    %c0_i32_1 = arith.constant 0 : i32
    return %c0_i32, %c0_i32_0 : i32, i32
  }
  func.func @transform_4(%arg0: i32) -> (i32, i32) {
    %c0_i32 = arith.constant 0 : i32
    %c0_i32_0 = arith.constant 0 : i32
    %c0_i32_1 = arith.constant 0 : i32
    return %c0_i32, %c0_i32_0 : i32, i32
  }
  func.func @transform_5(%arg0: i32) -> (i32, i32) {
    %c0_i32 = arith.constant 0 : i32
    %c0_i32_0 = arith.constant 0 : i32
    return %arg0, %c0_i32 : i32, i32
  }
}

</mosaic_0001>

<llo_original>
// kernel: actor_critic_forward.1
$region0: #{actor_critic_forward.1}
  #allocation0 [shape = 'u32[]', space=smem, size = 0x4, offset = 0x4, fixed_abs, tag = 'smem constant byte address 0x4 - core index']
  #allocation1 [shape = 'u32[144,128]{1,0:T(1,128)}', space=vmem, size = 0x12000, scoped, tag = 'internal scratch']
  %s0 = inlined_call_operand.vmem [shape: f32[8,8], index: 0, kind: input, shape index: {}]
  %s1 = inlined_call_operand.vmem [shape: f32[8,128], index: 1, kind: input, shape index: {}]
  %s2 = inlined_call_operand.vmem [shape: f32[1,128], index: 2, kind: input, shape index: {}]
  %s3 = inlined_call_operand.hbm [shape: f32[128,128], index: 3, kind: input, shape index: {}]
  %s4 = inlined_call_operand.vmem [shape: f32[1,128], index: 4, kind: input, shape index: {}]
  %s5 = inlined_call_operand.vmem [shape: f32[8,128], index: 5, kind: output, shape index: {}]
  %s6 = sld [smem:[#allocation0]]
  $region34: #{actor_critic_forward.1} parent=0
    _
  %s8 = ssub.s32 1, %s6
  %s9 = scalar_select 0, %s8, %s6
  $region1: #{actor_critic_forward.1} parent=0
    #allocation2 [shape = 'u8[65536]{0}', space=vmem, size = 0x10000, scoped, tag = 'input window, operand 3, single buffered']
    #allocation3 [shape = 's32[1]{0}', space=sflag, size = 0x4, scoped, tag = 'scoped memory for actor_critic_forward.1']
    %10 = vsyncpa [#allocation3], 0
    // Predicated region
    $region2: #{actor_critic_forward.1} parent=1 // pred_check
      _
    $region3: #{actor_critic_forward.1} parent=1 // pred_check_branch
      %12 = sbr.rel (0) target = $region5
    $region4: #{actor_critic_forward.1} parent=1 // pred_region
      _
    $region5: #{actor_critic_forward.1} parent=1 // pred_fallthru
      _
    // Predicated region
    $region6: #{actor_critic_forward.1} parent=1 // pred_check
      _
    $region7: #{actor_critic_forward.1} parent=1 // pred_check_branch
      %14 = sbr.rel (0) target = $region9
    $region8: #{actor_critic_forward.1} parent=1 // pred_region
      _
    $region9: #{actor_critic_forward.1} parent=1 // pred_fallthru
      _
    // Predicated region
    $region10: #{actor_critic_forward.1} parent=1 // pred_check
      _
    $region11: #{actor_critic_forward.1} parent=1 // pred_check_branch
      %16 = sbr.rel (0) target = $region13
    $region12: #{actor_critic_forward.1} parent=1 // pred_region
      _
    $region13: #{actor_critic_forward.1} parent=1 // pred_fallthru
      _
    // Predicated region
    $region14: #{actor_critic_forward.1} parent=1 // pred_check
      _
    $region15: #{actor_critic_forward.1} parent=1 // pred_check_branch
      %18 = sbr.rel (0) target = $region17
    $region16: #{actor_critic_forward.1} parent=1 // pred_region
      %s20 = ssub.s32 2048, 2048
      %21 = vsyncadd [#allocation3], %s20
      %s22 = sshll.u32 [#allocation2], 4
      %s23 = int_to_ptr.vmem [resolvable:$true] %s22
      %28 = dma.hbm_to_vmem [thread:$0]  %s3, 2048, %s23, [#allocation3], 128, 128, 8
    $region17: #{actor_critic_forward.1} parent=1 // pred_fallthru
      _
    // Predicated region
    $region18: #{actor_critic_forward.1} parent=1 // pred_check
      _
    $region19: #{actor_critic_forward.1} parent=1 // pred_check_branch
      %30 = sbr.rel (0) target = $region21
    $region20: #{actor_critic_forward.1} parent=1 // pred_region
      _
    $region21: #{actor_critic_forward.1} parent=1 // pred_fallthru
      _
    // Predicated region
    $region22: #{actor_critic_forward.1} parent=1 // pred_check
      _
    $region23: #{actor_critic_forward.1} parent=1 // pred_check_branch
      %32 = sbr.rel (0) target = $region25
    $region24: #{actor_critic_forward.1} parent=1 // pred_region
      %33 = dma.done [#allocation3], 2048
    $region25: #{actor_critic_forward.1} parent=1 // pred_fallthru
      _
    %v34 = vld [vmem:[%s0] sm:$0xff]
    %v35 = vld [vmem:[%s1] sm:$0xff]
    %v36 = vld [vmem:[%s2] sm:$0x1]
    %v38 = vlaneseq
    %v39 = vshrl.u32 %v38, 7
    %v40 = vsub.s32 0, %v39
    %v41 = vrot.slane %v36, %v40
    %vm43 = vcmask 64512
    %v45 = vsel %vm43, %v34, 0
    %47 = vmatprep.subr.mxu0 0.0
    %48 = vmatpush1.msra.mxu0 %v35
    %49 = vmatprep.subr.mxu0 0.0
    %50 = vmatpush1.msra.mxu0 0.0
    %51 = vmatprep.subr.mxu0 0.0
    %52 = vmatpush1.msra.mxu0 0.0
    %53 = vmatprep.subr.mxu0 0.0
    %54 = vmatpush1.msra.mxu0 0.0
    %55 = vmatprep.subr.mxu0 0.0
    %56 = vmatpush1.msra.mxu0 0.0
    %57 = vmatprep.subr.mxu0 0.0
    %58 = vmatpush1.msra.mxu0 0.0
    %59 = vmatprep.subr.mxu0 0.0
    %60 = vmatpush1.msra.mxu0 0.0
    %61 = vmatprep.subr.mxu0 0.0
    %62 = vmatpush1.msra.mxu0 0.0
    %63 = vmatprep.subr.mxu0 0.0
    %64 = vmatpush1.msra.mxu0 0.0
    %65 = vmatprep.subr.mxu0 0.0
    %66 = vmatpush1.msra.mxu0 0.0
    %67 = vmatprep.subr.mxu0 0.0
    %68 = vmatpush1.msra.mxu0 0.0
    %69 = vmatprep.subr.mxu0 0.0
    %70 = vmatpush1.msra.mxu0 0.0
    %71 = vmatprep.subr.mxu0 0.0
    %72 = vmatpush1.msra.mxu0 0.0
    %73 = vmatprep.subr.mxu0 0.0
    %74 = vmatpush1.msra.mxu0 0.0
    %75 = vmatprep.subr.mxu0 0.0
    %76 = vmatpush1.msra.mxu0 0.0
    %77 = vmatprep.subr.mxu0 0.0
    %78 = vmatpush1.msra.mxu0 0.0
    %79 = vmatprep.subr.mxu0 0.0
    %80 = vmatpush1.msra.mxu0 0.0
    %81 = vmatprep.subr.mxu0 0.0
    %82 = vmatpush1.msra.mxu0 0.0
    %83 = vmatprep.subr.mxu0 0.0
    %84 = vmatpush1.msra.mxu0 0.0
    %85 = vmatprep.subr.mxu0 0.0
    %86 = vmatpush1.msra.mxu0 0.0
    %87 = vmatprep.subr.mxu0 0.0
    %88 = vmatpush1.msra.mxu0 0.0
    %89 = vmatprep.subr.mxu0 0.0
    %90 = vmatpush1.msra.mxu0 0.0
    %91 = vmatprep.subr.mxu0 0.0
    %92 = vmatpush1.msra.mxu0 0.0
    %93 = vmatprep.subr.mxu0 0.0
    %94 = vmatpush1.msra.mxu0 0.0
    %95 = vmatprep.subr.mxu0 0.0
    %96 = vmatpush1.msra.mxu0 0.0
    %97 = vmatprep.subr.mxu0 0.0
    %98 = vmatpush1.msra.mxu0 0.0
    %99 = vmatprep.subr.mxu0 0.0
    %100 = vmatpush1.msra.mxu0 0.0
    %101 = vmatprep.subr.mxu0 0.0
    %102 = vmatpush1.msra.mxu0 0.0
    %103 = vmatprep.subr.mxu0 0.0
    %104 = vmatpush1.msra.mxu0 0.0
    %105 = vmatprep.subr.mxu0 0.0
    %106 = vmatpush1.msra.mxu0 0.0
    %107 = vmatprep.subr.mxu0 0.0
    %108 = vmatpush1.msra.mxu0 0.0
    %109 = vmatprep.subr.mxu0 0.0
    %110 = vmatpush1.msra.mxu0 0.0
    %111 = vmatprep.mubr.f32.mxu0 0.0
    %112 = vmatmul.mubr.f32.gmra.mrb[0].mxu0 %v45
    %v113 = vpop.f32.mrb[0].mxu0
    %v114 = vadd.f32 %v41, %v113
    %v115 = vpop.f32.mrb[0].mxu0
    %116 = vdwg.mxu0
    %v117 = vmax.f32 %v114, 0.0
    %v118 = vld [vmem:[#allocation2] sm:$0xff]
    %v119 = vld [vmem:[#allocation2 + $0x8] sm:$0xff]
    %v120 = vld [vmem:[#allocation2 + $0x10] sm:$0xff]
    %v121 = vld [vmem:[#allocation2 + $0x18] sm:$0xff]
    %v122 = vld [vmem:[#allocation2 + $0x20] sm:$0xff]
    %v123 = vld [vmem:[#allocation2 + $0x28] sm:$0xff]
    %v124 = vld [vmem:[#allocation2 + $0x30] sm:$0xff]
    %v125 = vld [vmem:[#allocation2 + $0x38] sm:$0xff]
    %v126 = vld [vmem:[#allocation2 + $0x40] sm:$0xff]
    %v127 = vld [vmem:[#allocation2 + $0x48] sm:$0xff]
    %v128 = vld [vmem:[#allocation2 + $0x50] sm:$0xff]
    %v129 = vld [vmem:[#allocation2 + $0x58] sm:$0xff]
    %v130 = vld [vmem:[#allocation2 + $0x60] sm:$0xff]
    %v131 = vld [vmem:[#allocation2 + $0x68] sm:$0xff]
    %v132 = vld [vmem:[#allocation2 + $0x70] sm:$0xff]
    %v133 = vld [vmem:[#allocation2 + $0x78] sm:$0xff]
    %v134 = vld [vmem:[%s4] sm:$0x1]
    %v136 = vlaneseq
    %v137 = vshrl.u32 %v136, 7
    %v138 = vsub.s32 0, %v137
    %v139 = vrot.slane %v134, %v138
    %141 = vmatprep.subr.mxu0 0.0
    %142 = vmatpush1.msra.mxu0 %v118
    %143 = vmatprep.subr.mxu0 0.0
    %144 = vmatpush1.msra.mxu0 %v119
    %145 = vmatprep.subr.mxu0 0.0
    %146 = vmatpush1.msra.mxu0 %v120
    %147 = vmatprep.subr.mxu0 0.0
    %148 = vmatpush1.msra.mxu0 %v121
    %149 = vmatprep.subr.mxu0 0.0
    %150 = vmatpush1.msra.mxu0 %v122
    %151 = vmatprep.subr.mxu0 0.0
    %152 = vmatpush1.msra.mxu0 %v123
    %153 = vmatprep.subr.mxu0 0.0
    %154 = vmatpush1.msra.mxu0 %v124
    %155 = vmatprep.subr.mxu0 0.0
    %156 = vmatpush1.msra.mxu0 %v125
    %157 = vmatprep.subr.mxu0 0.0
    %158 = vmatpush1.msra.mxu0 %v126
    %159 = vmatprep.subr.mxu0 0.0
    %160 = vmatpush1.msra.mxu0 %v127
    %161 = vmatprep.subr.mxu0 0.0
    %162 = vmatpush1.msra.mxu0 %v128
    %163 = vmatprep.subr.mxu0 0.0
    %164 = vmatpush1.msra.mxu0 %v129
    %165 = vmatprep.subr.mxu0 0.0
    %166 = vmatpush1.msra.mxu0 %v130
    %167 = vmatprep.subr.mxu0 0.0
    %168 = vmatpush1.msra.mxu0 %v131
    %169 = vmatprep.subr.mxu0 0.0
    %170 = vmatpush1.msra.mxu0 %v132
    %171 = vmatprep.subr.mxu0 0.0
    %172 = vmatpush1.msra.mxu0 %v133
    %173 = vmatprep.subr.mxu0 0.0
    %174 = vmatpush1.msra.mxu0 0.0
    %175 = vmatprep.subr.mxu0 0.0
    %176 = vmatpush1.msra.mxu0 0.0
    %177 = vmatprep.subr.mxu0 0.0
    %178 = vmatpush1.msra.mxu0 0.0
    %179 = vmatprep.subr.mxu0 0.0
    %180 = vmatpush1.msra.mxu0 0.0
    %181 = vmatprep.subr.mxu0 0.0
    %182 = vmatpush1.msra.mxu0 0.0
    %183 = vmatprep.subr.mxu0 0.0
    %184 = vmatpush1.msra.mxu0 0.0
    %185 = vmatprep.subr.mxu0 0.0
    %186 = vmatpush1.msra.mxu0 0.0
    %187 = vmatprep.subr.mxu0 0.0
    %188 = vmatpush1.msra.mxu0 0.0
    %189 = vmatprep.subr.mxu0 0.0
    %190 = vmatpush1.msra.mxu0 0.0
    %191 = vmatprep.subr.mxu0 0.0
    %192 = vmatpush1.msra.mxu0 0.0
    %193 = vmatprep.subr.mxu0 0.0
    %194 = vmatpush1.msra.mxu0 0.0
    %195 = vmatprep.subr.mxu0 0.0
    %196 = vmatpush1.msra.mxu0 0.0
    %197 = vmatprep.subr.mxu0 0.0
    %198 = vmatpush1.msra.mxu0 0.0
    %199 = vmatprep.subr.mxu0 0.0
    %200 = vmatpush1.msra.mxu0 0.0
    %201 = vmatprep.subr.mxu0 0.0
    %202 = vmatpush1.msra.mxu0 0.0
    %203 = vmatprep.subr.mxu0 0.0
    %204 = vmatpush1.msra.mxu0 0.0
    %205 = vmatprep.mubr.f32.mxu0 0.0
    %206 = vmatmul.mubr.f32.gmra.mrb[0].mxu0 %v117
    %v207 = vpop.f32.mrb[0].mxu0
    %v208 = vadd.f32 %v139, %v207
    %v209 = vpop.f32.mrb[0].mxu0
    %210 = vdwg.mxu0
    %v211 = vlaneseq
    %v212 = vand.u32 %v211, 127
    %vm213 = vcmp.lt.s32.totalorder %v212, 6
    %v214 = vsel %vm213, %v208, -3.4028235e+38
    %215 = vmax.xlane.f32.xlu0 %v214
    %v216 = vpop.xlane.xlu0 %215
    %v217 = vsub.f32 %v208, %v216
    %v218 = vmul.f32 %v217, 1.442695
    %v219 = vpow.pop %v218
    %v220 = vsel %vm213, %v219, 0.0
    %221 = vadd.xlane.f32.xlu0 %v220
    %v222 = vpop.xlane.xlu0 %221
    %v223 = vrcp.pop %v222
    %v224 = vmul.f32 %v222, %v223
    %v225 = vsub.f32 2.0, %v224
    %v226 = vmul.f32 %v223, %v225
    %v227 = vmul.f32 %v220, %v226
    %v228 = vsel %vm213, %v227, %v208
    %229 = vst [vmem:[%s5] sm:$0xff] %v228
    // Predicated region
    $region26: #{actor_critic_forward.1} parent=1 // pred_check
      _
    $region27: #{actor_critic_forward.1} parent=1 // pred_check_branch
      %231 = sbr.rel (0) target = $region29
    $region28: #{actor_critic_forward.1} parent=1 // pred_region
      _
    $region29: #{actor_critic_forward.1} parent=1 // pred_fallthru
      _
    // Predicated region
    $region30: #{actor_critic_forward.1} parent=1 // pred_check
      _
    $region31: #{actor_critic_forward.1} parent=1 // pred_check_branch
      %233 = sbr.rel (0) target = $region33
    $region32: #{actor_critic_forward.1} parent=1 // pred_region
      _
    $region33: #{actor_critic_forward.1} parent=1 // pred_fallthru
      _
    %234 = vsyncpa [#allocation3], 1

</llo_original>
